<compile_context>
chip_gen: v7x
topology: tpu7x:2x2x1
jax: 0.10.0
libtpu: 0.0.40
codegen_flags: <defaults>
</compile_context>

<pallas_src>
import jax
import jax.numpy as jnp
from jax.experimental import pallas as pl
from jax.experimental.pallas import tpu as pltpu


def _round_up(a: int, b: int) -> int:
    return ((a + b - 1) // b) * b


def kmeans_kernel(x_ref, embed2_ref, embed_norm_ref, out_ref):
    """One tile of rows: score = x @ (2*E) - ||E||^2, argmax over codes."""
    xe2 = jnp.dot(x_ref[...], embed2_ref[...],
                  preferred_element_type=jnp.float32)        # (tm, n_codes)  MXU
    score = xe2 - embed_norm_ref[...]                        # (tm, n_codes)  VPU
    idx = jnp.argmax(score, axis=1).astype(jnp.int32)        # (tm,)          XLU reduce
    out_ref[...] = idx[None, :]                              # lane-dense (1, tm) store


def kmeans_assign(x, embed, embed_norm, *, tm=1024):
    """x: (..., dim) -> codes: x.shape[:-1] (int32)."""
    dim, n_codes = embed.shape
    lead_shape = x.shape[:-1]
    flatten = x.reshape(-1, dim)
    n_rows = flatten.shape[0]

    # One-time prep on the XLA side: fold the factor 2 into the codebook and
    # keep the norms in f32 so the in-kernel compare is f32 regardless of x's dtype.
    # TODO(synk): if x arrives as bf16 (v5e), keep the dot in bf16 but leave this compare in f32.
    embed2 = (embed.astype(jnp.float32) * 2.0).astype(x.dtype)    # (dim, n_codes)
    embed_norm_f32 = embed_norm.astype(jnp.float32)               # (1, n_codes)

    # Tile size: large for HBM bandwidth, multiple of 128 for lane-dense
    # unmasked output stores; capped so tiny inputs don't over-pad, and split
    # so the grid keeps >= 2 steps when the input is big enough (v7x: 2 TCs).
    tm = max(128, min(tm, _round_up(n_rows, 128)))
    n_pad = _round_up(n_rows, tm)
    if n_pad // tm == 1 and n_pad >= 256:
        tm = _round_up(n_pad // 2, 128)
        n_pad = _round_up(n_rows, tm)
    num_tiles = n_pad // tm

    if n_pad != n_rows:
        flatten = jnp.pad(flatten, ((0, n_pad - n_rows), (0, 0)))

    out = pl.pallas_call(
        kmeans_kernel,
        out_shape=jax.ShapeDtypeStruct((num_tiles, tm), jnp.int32),
        grid_spec=pltpu.PrefetchScalarGridSpec(
            num_scalar_prefetch=0,
            grid=(num_tiles,),
            in_specs=[
                pl.BlockSpec((tm, dim), lambda i: (i, 0)),        # x row tile
                pl.BlockSpec((dim, n_codes), lambda i: (0, 0)),   # 2*codebook (VMEM-resident)
                pl.BlockSpec((1, n_codes), lambda i: (0, 0)),     # codebook norms
            ],
            out_specs=pl.BlockSpec((1, tm), lambda i: (i, 0)),    # lane-dense code row
        ),
        compiler_params=pltpu.CompilerParams(
            dimension_semantics=("parallel",)),
    )(flatten, embed2, embed_norm_f32)

    return out.reshape(-1)[:n_rows].reshape(lead_shape)


def reference_assign(x, embed, embed_norm):
    flatten = x.reshape(-1, embed.shape[0]).astype(jnp.float32)
    dist = -(jnp.sum(flatten ** 2, axis=1, keepdims=True)
             - 2.0 * flatten @ embed.astype(jnp.float32)
             + embed_norm.astype(jnp.float32))
    return jnp.argmax(dist, axis=1).reshape(x.shape[:-1]).astype(jnp.int32)


if __name__ == "__main__":
    # Synthetic deterministic "kmeans checkpoint" (no .npy load).
    dim, n_codes = 32, 128

    key = jax.random.PRNGKey(0)
    k_embed, k_x1, k_x2 = jax.random.split(key, 3)

    # centroids: shape (n_codes, dim) in the original file; the module stores
    # the transpose -> embed has shape (dim, n_codes).
    centroids = jax.random.normal(k_embed, (n_codes, dim), dtype=jnp.float32)
    embed = centroids.T                                            # (dim, n_codes)
    embed_norm = jnp.sum(embed ** 2, axis=0, keepdims=True)        # (1, n_codes)

    # Case 1: small (batch=2, seq=8) -> exercises padding to one 128-row tile.
    x1 = jax.random.normal(k_x1, (2, 8, dim), dtype=jnp.float32)
    codes1 = jax.block_until_ready(kmeans_assign(x1, embed, embed_norm))
    ref1 = reference_assign(x1, embed, embed_norm)
    assert codes1.shape == (2, 8)
    assert bool(jnp.all(codes1 == ref1))

    # Case 2: awkward row count (3*100=300 rows) -> exercises cdiv padding and
    # a multi-step grid (>= 2 tiles).
    x2 = jax.random.normal(k_x2, (3, 100, dim), dtype=jnp.float32)
    codes2 = jax.block_until_ready(kmeans_assign(x2, embed, embed_norm))
    ref2 = reference_assign(x2, embed, embed_norm)
    assert codes2.shape == (3, 100)
    assert bool(jnp.all(codes2 == ref2))

    print("KERNEL_OK")
</pallas_src>

<mosaic_0001>
module attributes {stable_mosaic.version = 11 : i64} {
  func.func @kmeans_kernel(%arg0: i32, %arg1: memref<128x32xf32, #tpu.memory_space<vmem>>, %arg2: memref<32x128xf32, #tpu.memory_space<vmem>>, %arg3: memref<1x128xf32, #tpu.memory_space<vmem>>, %arg4: memref<1x128xi32, #tpu.memory_space<vmem>>) attributes {dimension_semantics = [#tpu.dimension_semantics<parallel>], iteration_bounds = array<i64: 1>, scalar_prefetch = 0 : i64, scratch_operands = 0 : i64, tpu.core_type = #tpu.core_type<tc>, window_params = [{transform_indices = @transform_0, window_bounds = array<i64: 128, 32>}, {pipeline_mode = #tpu.pipeline_mode<synchronous>, transform_indices = @transform_1, window_bounds = array<i64: 32, 128>}, {pipeline_mode = #tpu.pipeline_mode<synchronous>, transform_indices = @transform_2, window_bounds = array<i64: 1, 128>}, {transform_indices = @transform_3, window_bounds = array<i64: 1, 128>}]} {
    %c0 = arith.constant 0 : index
    %c0_0 = arith.constant 0 : index
    %0 = vector.load %arg1[%c0, %c0_0] : memref<128x32xf32, #tpu.memory_space<vmem>>, vector<128x32xf32>
    %c0_1 = arith.constant 0 : index
    %c0_2 = arith.constant 0 : index
    %1 = vector.load %arg2[%c0_1, %c0_2] : memref<32x128xf32, #tpu.memory_space<vmem>>, vector<32x128xf32>
    %cst = arith.constant dense<0.000000e+00> : vector<128x128xf32>
    %2 = tpu.matmul %0, %1, %cst {dimension_numbers = #tpu.dot_dimension_numbers<[1], [0], [0], [1], [0, 0, 1, 1], [], []>} : vector<128x32xf32>, vector<32x128xf32>, vector<128x128xf32> -> vector<128x128xf32>
    %c0_3 = arith.constant 0 : index
    %c0_4 = arith.constant 0 : index
    %3 = vector.load %arg3[%c0_3, %c0_4] : memref<1x128xf32, #tpu.memory_space<vmem>>, vector<1x128xf32>
    %4 = vector.broadcast %3 : vector<1x128xf32> to vector<128x128xf32>
    %5 = arith.subf %2, %4 : vector<128x128xf32>
    %6 = tpu.reduce_index %5 {axis = 1 : i32, kind = #tpu.reduction_kind<arg_max>} : vector<128x128xf32> -> vector<128xi32>
    %7 = vector.shape_cast %6 : vector<128xi32> to vector<1x128xi32>
    %c0_5 = arith.constant 0 : index
    %c0_6 = arith.constant 0 : index
    %8 = vector.load %arg4[%c0_5, %c0_6] : memref<1x128xi32, #tpu.memory_space<vmem>>, vector<1x128xi32>
    tpu.vector_store %arg4[%c0_5, %c0_6], %7 {strides = array<i32>} : memref<1x128xi32, #tpu.memory_space<vmem>>, vector<1x128xi32>,
    return
  }
  func.func @transform_0(%arg0: i32) -> (i32, i32) {
    %c0_i32 = arith.constant 0 : i32
    %c0_i32_0 = arith.constant 0 : i32
    return %arg0, %c0_i32 : i32, i32
  }
  func.func @transform_1(%arg0: i32) -> (i32, i32) {
    %c0_i32 = arith.constant 0 : i32
    %c0_i32_0 = arith.constant 0 : i32
    %c0_i32_1 = arith.constant 0 : i32
    return %c0_i32, %c0_i32_0 : i32, i32
  }
  func.func @transform_2(%arg0: i32) -> (i32, i32) {
    %c0_i32 = arith.constant 0 : i32
    %c0_i32_0 = arith.constant 0 : i32
    %c0_i32_1 = arith.constant 0 : i32
    return %c0_i32, %c0_i32_0 : i32, i32
  }
  func.func @transform_3(%arg0: i32) -> (i32, i32) {
    %c0_i32 = arith.constant 0 : i32
    %c0_i32_0 = arith.constant 0 : i32
    return %arg0, %c0_i32 : i32, i32
  }
}

</mosaic_0001>

<llo_original>
// kernel: tpu_custom_call.1
$region0: #{tpu_custom_call.1}
  #allocation0 [shape = 'u32[]', space=smem, size = 0x4, offset = 0x4, fixed_abs, tag = 'smem constant byte address 0x4 - core index']
  #allocation1 [shape = 'u32[144,128]{1,0:T(1,128)}', space=vmem, size = 0x12000, scoped, tag = 'internal scratch']
  %s0 = inlined_call_operand.vmem [shape: f32[128,32], index: 0, kind: input, shape index: {}]
  %s1 = inlined_call_operand.vmem [shape: f32[32,128], index: 1, kind: input, shape index: {}]
  %s2 = inlined_call_operand.vmem [shape: f32[1,128], index: 2, kind: input, shape index: {}]
  %s3 = inlined_call_operand.hbm [shape: s32[1,128], index: 3, kind: output, shape index: {}]
  %s4 = sld [smem:[#allocation0]]
  $region22: #{tpu_custom_call.1} parent=0
    _
  %s6 = ssub.s32 1, %s4
  %s7 = scalar_select 0, %s6, %s4
  $region1: #{tpu_custom_call.1} parent=0
    #allocation2 [shape = 'u8[512]{0}', space=vmem, size = 0x400, scoped, tag = 'output window, operand 0, single buffered']
    #allocation3 [shape = 's32[1]{0}', space=sflag, size = 0x4, scoped, tag = 'scoped memory for tpu_custom_call.1']
    %8 = vsyncpa [#allocation3], 0
    // Predicated region
    $region2: #{tpu_custom_call.1} parent=1 // pred_check
      _
    $region3: #{tpu_custom_call.1} parent=1 // pred_check_branch
      %10 = sbr.rel (0) target = $region5
    $region4: #{tpu_custom_call.1} parent=1 // pred_region
      _
    $region5: #{tpu_custom_call.1} parent=1 // pred_fallthru
      _
    // Predicated region
    $region6: #{tpu_custom_call.1} parent=1 // pred_check
      _
    $region7: #{tpu_custom_call.1} parent=1 // pred_check_branch
      %12 = sbr.rel (0) target = $region9
    $region8: #{tpu_custom_call.1} parent=1 // pred_region
      _
    $region9: #{tpu_custom_call.1} parent=1 // pred_fallthru
      _
    // Predicated region
    $region10: #{tpu_custom_call.1} parent=1 // pred_check
      _
    $region11: #{tpu_custom_call.1} parent=1 // pred_check_branch
      %14 = sbr.rel (0) target = $region13
    $region12: #{tpu_custom_call.1} parent=1 // pred_region
      _
    $region13: #{tpu_custom_call.1} parent=1 // pred_fallthru
      _
    %v15 = vld [vmem:[%s0] sm:$0xff]
    %v16 = vld [vmem:[%s0 + $0x8] sm:$0xff]
    %v17 = vld [vmem:[%s0 + $0x10] sm:$0xff]
    %v18 = vld [vmem:[%s0 + $0x18] sm:$0xff]
    %v19 = vld [vmem:[%s0 + $0x20] sm:$0xff]
    %v20 = vld [vmem:[%s0 + $0x28] sm:$0xff]
    %v21 = vld [vmem:[%s0 + $0x30] sm:$0xff]
    %v22 = vld [vmem:[%s0 + $0x38] sm:$0xff]
    %v23 = vld [vmem:[%s0 + $0x40] sm:$0xff]
    %v24 = vld [vmem:[%s0 + $0x48] sm:$0xff]
    %v25 = vld [vmem:[%s0 + $0x50] sm:$0xff]
    %v26 = vld [vmem:[%s0 + $0x58] sm:$0xff]
    %v27 = vld [vmem:[%s0 + $0x60] sm:$0xff]
    %v28 = vld [vmem:[%s0 + $0x68] sm:$0xff]
    %v29 = vld [vmem:[%s0 + $0x70] sm:$0xff]
    %v30 = vld [vmem:[%s0 + $0x78] sm:$0xff]
    %v31 = vld [vmem:[%s1] sm:$0xff]
    %v32 = vld [vmem:[%s1 + $0x8] sm:$0xff]
    %v33 = vld [vmem:[%s1 + $0x10] sm:$0xff]
    %v34 = vld [vmem:[%s1 + $0x18] sm:$0xff]
    %vm35 = vcmask 261120
    %v37 = vsel %vm35, %v15, 0
    %v40 = vsel %vm35, %v16, 0
    %v43 = vsel %vm35, %v17, 0
    %v46 = vsel %vm35, %v18, 0
    %v49 = vsel %vm35, %v19, 0
    %v52 = vsel %vm35, %v20, 0
    %v55 = vsel %vm35, %v21, 0
    %v58 = vsel %vm35, %v22, 0
    %v61 = vsel %vm35, %v23, 0
    %v64 = vsel %vm35, %v24, 0
    %v67 = vsel %vm35, %v25, 0
    %v70 = vsel %vm35, %v26, 0
    %v73 = vsel %vm35, %v27, 0
    %v76 = vsel %vm35, %v28, 0
    %v79 = vsel %vm35, %v29, 0
    %v82 = vsel %vm35, %v30, 0
    %84 = vmatprep.subr.mxu0 0.0
    %85 = vmatpush1.msra.mxu0 %v31
    %86 = vmatprep.subr.mxu0 0.0
    %87 = vmatpush1.msra.mxu0 %v32
    %88 = vmatprep.subr.mxu0 0.0
    %89 = vmatpush1.msra.mxu0 %v33
    %90 = vmatprep.subr.mxu0 0.0
    %91 = vmatpush1.msra.mxu0 %v34
    %92 = vmatprep.subr.mxu0 0.0
    %93 = vmatpush1.msra.mxu0 0.0
    %94 = vmatprep.subr.mxu0 0.0
    %95 = vmatpush1.msra.mxu0 0.0
    %96 = vmatprep.subr.mxu0 0.0
    %97 = vmatpush1.msra.mxu0 0.0
    %98 = vmatprep.subr.mxu0 0.0
    %99 = vmatpush1.msra.mxu0 0.0
    %100 = vmatprep.subr.mxu0 0.0
    %101 = vmatpush1.msra.mxu0 0.0
    %102 = vmatprep.subr.mxu0 0.0
    %103 = vmatpush1.msra.mxu0 0.0
    %104 = vmatprep.subr.mxu0 0.0
    %105 = vmatpush1.msra.mxu0 0.0
    %106 = vmatprep.subr.mxu0 0.0
    %107 = vmatpush1.msra.mxu0 0.0
    %108 = vmatprep.subr.mxu0 0.0
    %109 = vmatpush1.msra.mxu0 0.0
    %110 = vmatprep.subr.mxu0 0.0
    %111 = vmatpush1.msra.mxu0 0.0
    %112 = vmatprep.subr.mxu0 0.0
    %113 = vmatpush1.msra.mxu0 0.0
    %114 = vmatprep.subr.mxu0 0.0
    %115 = vmatpush1.msra.mxu0 0.0
    %116 = vmatprep.subr.mxu0 0.0
    %117 = vmatpush1.msra.mxu0 0.0
    %118 = vmatprep.subr.mxu0 0.0
    %119 = vmatpush1.msra.mxu0 0.0
    %120 = vmatprep.subr.mxu0 0.0
    %121 = vmatpush1.msra.mxu0 0.0
    %122 = vmatprep.subr.mxu0 0.0
    %123 = vmatpush1.msra.mxu0 0.0
    %124 = vmatprep.subr.mxu0 0.0
    %125 = vmatpush1.msra.mxu0 0.0
    %126 = vmatprep.subr.mxu0 0.0
    %127 = vmatpush1.msra.mxu0 0.0
    %128 = vmatprep.subr.mxu0 0.0
    %129 = vmatpush1.msra.mxu0 0.0
    %130 = vmatprep.subr.mxu0 0.0
    %131 = vmatpush1.msra.mxu0 0.0
    %132 = vmatprep.subr.mxu0 0.0
    %133 = vmatpush1.msra.mxu0 0.0
    %134 = vmatprep.subr.mxu0 0.0
    %135 = vmatpush1.msra.mxu0 0.0
    %136 = vmatprep.subr.mxu0 0.0
    %137 = vmatpush1.msra.mxu0 0.0
    %138 = vmatprep.subr.mxu0 0.0
    %139 = vmatpush1.msra.mxu0 0.0
    %140 = vmatprep.subr.mxu0 0.0
    %141 = vmatpush1.msra.mxu0 0.0
    %142 = vmatprep.subr.mxu0 0.0
    %143 = vmatpush1.msra.mxu0 0.0
    %144 = vmatprep.subr.mxu0 0.0
    %145 = vmatpush1.msra.mxu0 0.0
    %146 = vmatprep.subr.mxu0 0.0
    %147 = vmatpush1.msra.mxu0 0.0
    %148 = vmatprep.mubr.f32.mxu0 0.0
    %149 = vmatmul.mubr.f32.gmra.mrb[0].mxu0 %v37
    %v150 = vpop.f32.mrb[0].mxu0
    %v151 = vadd.f32 0.0, %v150
    %v152 = vpop.f32.mrb[0].mxu0
    %153 = vmatprep.mubr.f32.mxu0 0.0
    %154 = vmatmul.mubr.f32.gmra.mrb[0].mxu0 %v40
    %v155 = vpop.f32.mrb[0].mxu0
    %v156 = vadd.f32 0.0, %v155
    %v157 = vpop.f32.mrb[0].mxu0
    %158 = vmatprep.mubr.f32.mxu0 0.0
    %159 = vmatmul.mubr.f32.gmra.mrb[0].mxu0 %v43
    %v160 = vpop.f32.mrb[0].mxu0
    %v161 = vadd.f32 0.0, %v160
    %v162 = vpop.f32.mrb[0].mxu0
    %163 = vmatprep.mubr.f32.mxu0 0.0
    %164 = vmatmul.mubr.f32.gmra.mrb[0].mxu0 %v46
    %v165 = vpop.f32.mrb[0].mxu0
    %v166 = vadd.f32 0.0, %v165
    %v167 = vpop.f32.mrb[0].mxu0
    %168 = vmatprep.mubr.f32.mxu0 0.0
    %169 = vmatmul.mubr.f32.gmra.mrb[0].mxu0 %v49
    %v170 = vpop.f32.mrb[0].mxu0
    %v171 = vadd.f32 0.0, %v170
    %v172 = vpop.f32.mrb[0].mxu0
    %173 = vmatprep.mubr.f32.mxu0 0.0
    %174 = vmatmul.mubr.f32.gmra.mrb[0].mxu0 %v52
    %v175 = vpop.f32.mrb[0].mxu0
    %v176 = vadd.f32 0.0, %v175
    %v177 = vpop.f32.mrb[0].mxu0
    %178 = vmatprep.mubr.f32.mxu0 0.0
    %179 = vmatmul.mubr.f32.gmra.mrb[0].mxu0 %v55
    %v180 = vpop.f32.mrb[0].mxu0
    %v181 = vadd.f32 0.0, %v180
    %v182 = vpop.f32.mrb[0].mxu0
    %183 = vmatprep.mubr.f32.mxu0 0.0
    %184 = vmatmul.mubr.f32.gmra.mrb[0].mxu0 %v58
    %v185 = vpop.f32.mrb[0].mxu0
    %v186 = vadd.f32 0.0, %v185
    %v187 = vpop.f32.mrb[0].mxu0
    %188 = vmatprep.mubr.f32.mxu0 0.0
    %189 = vmatmul.mubr.f32.gmra.mrb[0].mxu0 %v61
    %v190 = vpop.f32.mrb[0].mxu0
    %v191 = vadd.f32 0.0, %v190
    %v192 = vpop.f32.mrb[0].mxu0
    %193 = vmatprep.mubr.f32.mxu0 0.0
    %194 = vmatmul.mubr.f32.gmra.mrb[0].mxu0 %v64
    %v195 = vpop.f32.mrb[0].mxu0
    %v196 = vadd.f32 0.0, %v195
    %v197 = vpop.f32.mrb[0].mxu0
    %198 = vmatprep.mubr.f32.mxu0 0.0
    %199 = vmatmul.mubr.f32.gmra.mrb[0].mxu0 %v67
    %v200 = vpop.f32.mrb[0].mxu0
    %v201 = vadd.f32 0.0, %v200
    %v202 = vpop.f32.mrb[0].mxu0
    %203 = vmatprep.mubr.f32.mxu0 0.0
    %204 = vmatmul.mubr.f32.gmra.mrb[0].mxu0 %v70
    %v205 = vpop.f32.mrb[0].mxu0
    %v206 = vadd.f32 0.0, %v205
    %v207 = vpop.f32.mrb[0].mxu0
    %208 = vmatprep.mubr.f32.mxu0 0.0
    %209 = vmatmul.mubr.f32.gmra.mrb[0].mxu0 %v73
    %v210 = vpop.f32.mrb[0].mxu0
    %v211 = vadd.f32 0.0, %v210
    %v212 = vpop.f32.mrb[0].mxu0
    %213 = vmatprep.mubr.f32.mxu0 0.0
    %214 = vmatmul.mubr.f32.gmra.mrb[0].mxu0 %v76
    %v215 = vpop.f32.mrb[0].mxu0
    %v216 = vadd.f32 0.0, %v215
    %v217 = vpop.f32.mrb[0].mxu0
    %218 = vmatprep.mubr.f32.mxu0 0.0
    %219 = vmatmul.mubr.f32.gmra.mrb[0].mxu0 %v79
    %v220 = vpop.f32.mrb[0].mxu0
    %v221 = vadd.f32 0.0, %v220
    %v222 = vpop.f32.mrb[0].mxu0
    %223 = vmatprep.mubr.f32.mxu0 0.0
    %224 = vmatmul.mubr.f32.gmra.mrb[0].mxu0 %v82
    %v225 = vpop.f32.mrb[0].mxu0
    %v226 = vadd.f32 0.0, %v225
    %v227 = vpop.f32.mrb[0].mxu0
    %228 = vdwg.mxu0
    %v229 = vld [vmem:[%s2] sm:$0x1]
    %v231 = vlaneseq
    %v232 = vshrl.u32 %v231, 7
    %v233 = vsub.s32 0, %v232
    %v234 = vrot.slane %v229, %v233
    %v236 = vsub.f32 %v151, %v234
    %v237 = vsub.f32 %v156, %v234
    %v238 = vsub.f32 %v161, %v234
    %v239 = vsub.f32 %v166, %v234
    %v240 = vsub.f32 %v171, %v234
    %v241 = vsub.f32 %v176, %v234
    %v242 = vsub.f32 %v181, %v234
    %v243 = vsub.f32 %v186, %v234
    %v244 = vsub.f32 %v191, %v234
    %v245 = vsub.f32 %v196, %v234
    %v246 = vsub.f32 %v201, %v234
    %v247 = vsub.f32 %v206, %v234
    %v248 = vsub.f32 %v211, %v234
    %v249 = vsub.f32 %v216, %v234
    %v250 = vsub.f32 %v221, %v234
    %v251 = vsub.f32 %v226, %v234
    %252 = vmax.index.xlane.f32.xlu0 %v236
    %v253 = vpop.xlane.xlu0 %252
    %254 = vmax.index.xlane.f32.xlu0 %v237
    %v255 = vpop.xlane.xlu0 %254
    %256 = vmax.index.xlane.f32.xlu0 %v238
    %v257 = vpop.xlane.xlu0 %256
    %258 = vmax.index.xlane.f32.xlu0 %v239
    %v259 = vpop.xlane.xlu0 %258
    %260 = vmax.index.xlane.f32.xlu0 %v240
    %v261 = vpop.xlane.xlu0 %260
    %262 = vmax.index.xlane.f32.xlu0 %v241
    %v263 = vpop.xlane.xlu0 %262
    %264 = vmax.index.xlane.f32.xlu0 %v242
    %v265 = vpop.xlane.xlu0 %264
    %266 = vmax.index.xlane.f32.xlu0 %v243
    %v267 = vpop.xlane.xlu0 %266
    %268 = vmax.index.xlane.f32.xlu0 %v244
    %v269 = vpop.xlane.xlu0 %268
    %270 = vmax.index.xlane.f32.xlu0 %v245
    %v271 = vpop.xlane.xlu0 %270
    %272 = vmax.index.xlane.f32.xlu0 %v246
    %v273 = vpop.xlane.xlu0 %272
    %274 = vmax.index.xlane.f32.xlu0 %v247
    %v275 = vpop.xlane.xlu0 %274
    %276 = vmax.index.xlane.f32.xlu0 %v248
    %v277 = vpop.xlane.xlu0 %276
    %278 = vmax.index.xlane.f32.xlu0 %v249
    %v279 = vpop.xlane.xlu0 %278
    %280 = vmax.index.xlane.f32.xlu0 %v250
    %v281 = vpop.xlane.xlu0 %280
    %282 = vmax.index.xlane.f32.xlu0 %v251
    %v283 = vpop.xlane.xlu0 %282
    %v284 = vlaneseq
    %v285 = vand.u32 %v284, 127
    %v286 = vlaneseq
    %v287 = vshrl.u32 %v286, 7
    %v288 = vsub.s32 %v285, %v287
    %v289 = vrot.slane %v253, %v288
    %v290 = vadd.s32 %v285, 4294967288
    %v291 = vlaneseq
    %v292 = vshrl.u32 %v291, 7
    %v293 = vsub.s32 %v290, %v292
    %v294 = vrot.slane %v255, %v293
    %vm295 = vcmask 130112
    %v296 = vsel %vm295, %v294, %v289
    %v297 = vadd.s32 %v285, 4294967280
    %v298 = vlaneseq
    %v299 = vshrl.u32 %v298, 7
    %v300 = vsub.s32 %v297, %v299
    %v301 = vrot.slane %v257, %v300
    %vm302 = vcmask 195712
    %v303 = vsel %vm302, %v301, %v296
    %v304 = vadd.s32 %v285, 4294967272
    %v305 = vlaneseq
    %v306 = vshrl.u32 %v305, 7
    %v307 = vsub.s32 %v304, %v306
    %v308 = vrot.slane %v259, %v307
    %vm309 = vcmask 261312
    %v310 = vsel %vm309, %v308, %v303
    %v311 = vadd.s32 %v285, 4294967264
    %v312 = vlaneseq
    %v313 = vshrl.u32 %v312, 7
    %v314 = vsub.s32 %v311, %v313
    %v315 = vrot.slane %v261, %v314
    %vm316 = vcmask 326912
    %v317 = vsel %vm316, %v315, %v310
    %v318 = vadd.s32 %v285, 4294967256
    %v319 = vlaneseq
    %v320 = vshrl.u32 %v319, 7
    %v321 = vsub.s32 %v318, %v320
    %v322 = vrot.slane %v263, %v321
    %vm323 = vcmask 392512
    %v324 = vsel %vm323, %v322, %v317
    %v325 = vadd.s32 %v285, 4294967248
    %v326 = vlaneseq
    %v327 = vshrl.u32 %v326, 7
    %v328 = vsub.s32 %v325, %v327
    %v329 = vrot.slane %v265, %v328
    %vm330 = vcmask 458112
    %v331 = vsel %vm330, %v329, %v324
    %v332 = vadd.s32 %v285, 4294967240
    %v333 = vlaneseq
    %v334 = vshrl.u32 %v333, 7
    %v335 = vsub.s32 %v332, %v334
    %v336 = vrot.slane %v267, %v335
    %vm337 = vcmask 523712
    %v338 = vsel %vm337, %v336, %v331
    %v339 = vadd.s32 %v285, 4294967232
    %v340 = vlaneseq
    %v341 = vshrl.u32 %v340, 7
    %v342 = vsub.s32 %v339, %v341
    %v343 = vrot.slane %v269, %v342
    %vm344 = vcmask 589312
    %v345 = vsel %vm344, %v343, %v338
    %v346 = vadd.s32 %v285, 4294967224
    %v347 = vlaneseq
    %v348 = vshrl.u32 %v347, 7
    %v349 = vsub.s32 %v346, %v348
    %v350 = vrot.slane %v271, %v349
    %vm351 = vcmask 654912
    %v352 = vsel %vm351, %v350, %v345
    %v353 = vadd.s32 %v285, 4294967216
    %v354 = vlaneseq
    %v355 = vshrl.u32 %v354, 7
    %v356 = vsub.s32 %v353, %v355
    %v357 = vrot.slane %v273, %v356
    %vm358 = vcmask 720512
    %v359 = vsel %vm358, %v357, %v352
    %v360 = vadd.s32 %v285, 4294967208
    %v361 = vlaneseq
    %v362 = vshrl.u32 %v361, 7
    %v363 = vsub.s32 %v360, %v362
    %v364 = vrot.slane %v275, %v363
    %vm365 = vcmask 786112
    %v366 = vsel %vm365, %v364, %v359
    %v367 = vadd.s32 %v285, 4294967200
    %v368 = vlaneseq
    %v369 = vshrl.u32 %v368, 7
    %v370 = vsub.s32 %v367, %v369
    %v371 = vrot.slane %v277, %v370
    %vm372 = vcmask 851712
    %v373 = vsel %vm372, %v371, %v366
    %v374 = vadd.s32 %v285, 4294967192
    %v375 = vlaneseq
    %v376 = vshrl.u32 %v375, 7
    %v377 = vsub.s32 %v374, %v376
    %v378 = vrot.slane %v279, %v377
    %vm379 = vcmask 917312
    %v380 = vsel %vm379, %v378, %v373
    %v381 = vadd.s32 %v285, 4294967184
    %v382 = vlaneseq
    %v383 = vshrl.u32 %v382, 7
    %v384 = vsub.s32 %v381, %v383
    %v385 = vrot.slane %v281, %v384
    %vm386 = vcmask 982912
    %v387 = vsel %vm386, %v385, %v380
    %v388 = vadd.s32 %v285, 4294967176
    %v389 = vlaneseq
    %v390 = vshrl.u32 %v389, 7
    %v391 = vsub.s32 %v388, %v390
    %v392 = vrot.slane %v283, %v391
    %vm393 = vcmask 1048512
    %v394 = vsel %vm393, %v392, %v387
    %395 = vst [vmem:[#allocation2] sm:$0x1] %v394
    // Predicated region
    $region14: #{tpu_custom_call.1} parent=1 // pred_check
      _
    $region15: #{tpu_custom_call.1} parent=1 // pred_check_branch
      %397 = sbr.rel (0) target = $region17
    $region16: #{tpu_custom_call.1} parent=1 // pred_region
      %s399 = ssub.s32 16, 16
      %400 = vsyncadd [#allocation3], %s399
      %s402 = sshll.u32 [#allocation2], 4
      %s403 = int_to_ptr.vmem [resolvable:$true] %s402
      %405 = dma.vmem_to_hbm [thread:$0]  %s403, 16, %s3, [#allocation3]
    $region17: #{tpu_custom_call.1} parent=1 // pred_fallthru
      _
    // Predicated region
    $region18: #{tpu_custom_call.1} parent=1 // pred_check
      _
    $region19: #{tpu_custom_call.1} parent=1 // pred_check_branch
      %407 = sbr.rel (0) target = $region21
    $region20: #{tpu_custom_call.1} parent=1 // pred_region
      %408 = dma.done [#allocation3], 16
    $region21: #{tpu_custom_call.1} parent=1 // pred_fallthru
      _
    %409 = vsyncpa [#allocation3], 1

</llo_original>
